<compile_context>
chip_gen: v5e
topology: v5e:2x2
jax: 0.10.0
libtpu: 0.0.40
codegen_flags: <defaults>
</compile_context>

<pallas_src>
import functools

import jax
import jax.numpy as jnp
from jax.experimental import pallas as pl
from jax.experimental.pallas import tpu as pltpu


def _ls_ce_partial_kernel(logits_ref, target_ref, out_ref, *, n_total, use_mxu_rowsum):
    # logits_ref: (TN, C) native dtype, target_ref: (TN, 1) int32,
    # out_ref: (8, 128) f32 per-tile partials (sublane 0: lane0=smooth, lane1=picked).
    i = pl.program_id(0)
    xl = logits_ref[...]                                          # (TN, C) native dtype
    tn, c = xl.shape
    x = xl.astype(jnp.float32)                                    # f32 for m / lse / exp

    # Row validity for the last (possibly partial) tile.  Applied ONLY to the
    # per-row scalars below (select, not multiply), so garbage pad rows are inert.
    row_ids = jax.lax.broadcasted_iota(jnp.int32, (tn, 1), 0) + i * tn
    row_valid = row_ids < n_total                                 # (TN, 1) bool

    # log-softmax pieces (no log_preds materialization), f32.
    m = jnp.max(x, axis=-1, keepdims=True)                        # (TN, 1)
    lse = jnp.log(jnp.sum(jnp.exp(x - m), axis=-1, keepdims=True))

    # raw-x row sum: MXU offload for bf16 (exact: *1.0, f32 accumulate), VPU for f32.
    if use_mxu_rowsum:
        ones = jnp.ones((c, 128), xl.dtype)
        rowsum = jnp.dot(xl, ones, preferred_element_type=jnp.float32)[:, :1]
    else:
        rowsum = jnp.sum(x, axis=-1, keepdims=True)               # (TN, 1)

    # -sum_c log_softmax(x)_c  ==  C*(m + lse) - sum_c x_c
    smooth_row = c * (m + lse) - rowsum                           # (TN, 1)

    # log_softmax(x)[target] == x[target] - m - lse
    # one-hot select on the NATIVE tile against a lane-only (1, C) iota.
    col_ids = jax.lax.broadcasted_iota(jnp.int32, (1, c), 1)      # (1, C)
    tgt = target_ref[...]                                         # (TN, 1) int32
    eq = col_ids == tgt                                           # (TN, C) bool (broadcast)
    picked_x = jnp.sum(jnp.where(eq, xl, jnp.zeros_like(xl)),
                       axis=-1, keepdims=True).astype(jnp.float32)
    picked_row = picked_x - m - lse                               # (TN, 1)

    # Per-row scalar masking with where (NOT multiply) so NaN/Inf pad rows vanish.
    smooth_part = jnp.sum(jnp.where(row_valid, smooth_row, 0.0))  # scalar
    picked_part = jnp.sum(jnp.where(row_valid, picked_row, 0.0))  # scalar

    # Lane-dense (8, 128) block: lane 0 = smooth, lane 1 = picked, rest 0.
    # (All 8 sublanes carry the same values; the epilogue reads sublane 0.)
    lane = jax.lax.broadcasted_iota(jnp.int32, (8, 128), 1)
    out_ref[...] = jnp.where(lane == 0, smooth_part,
                             jnp.where(lane == 1, picked_part, 0.0))


def _vmem_capacity_bytes():
    try:
        return int(pltpu.get_tpu_info().vmem_capacity_bytes)
    except Exception:
        return 64 * 1024 * 1024  # conservative (v7x-sized) fallback


def _choose_tile_rows(n, c, dtype):
    """Pick a batch-tile size TN: multiple of the dtype's sublane granularity,
    sized from the chip's real VMEM while counting in-kernel f32 temporaries,
    and (on small-VMEM / v7x-like chips) split into >=2 tiles when possible."""
    itemsize = jnp.dtype(dtype).itemsize
    gran = max(8, 32 // max(itemsize, 1))        # 8 for f32, 16 for bf16, 32 for int8
    cap = _vmem_capacity_bytes()
    small_vmem = cap < 96 * 1024 * 1024          # v7x-like (64 MiB per TC)

    # Per-row live bytes: double-buffered native input tile + f32 upcast +
    # exp temporary + one-hot/select temporary.
    bytes_per_row = (2 * itemsize + 4 + 4 + itemsize) * max(c, 1)
    budget = int(cap * 0.4)                      # headroom for outputs / compiler scratch
    rows = max(budget // bytes_per_row, gran)
    rows = min(rows, 1024 if small_vmem else 2048)

    n_padded = ((n + gran - 1) // gran) * gran
    rows = min(rows, n_padded)

    # On 2-TC chips make sure there are at least 2 grid steps when possible.
    if small_vmem and rows >= n_padded and n_padded >= 2 * gran:
        half = (n_padded + 1) // 2
        rows = max(gran, ((half + gran - 1) // gran) * gran)

    return max((rows // gran) * gran, gran)


def label_smoothing_cross_entropy(logits, target, eps=0.05, reduction="mean",
                                  tile_rows=None):
    """Pallas TPU implementation of LabelSmoothingCrossEntropy."""
    n, c = logits.shape
    target2d = target.reshape(n, 1).astype(jnp.int32)

    itemsize = jnp.dtype(logits.dtype).itemsize
    gran = max(8, 32 // max(itemsize, 1))
    if tile_rows is not None:
        # Validate user override against the (sublane, lane) granularity.
        tn = max(gran, (int(tile_rows) // gran) * gran)
    else:
        tn = _choose_tile_rows(n, c, logits.dtype)
    num_tiles = pl.cdiv(n, tn)

    cap = _vmem_capacity_bytes()
    vmem_limit = max(32 * 1024 * 1024, cap // 2)   # 64 MiB on v5e/v6e, 32 MiB on v7x

    use_mxu_rowsum = (jnp.dtype(logits.dtype) == jnp.bfloat16)

    partials = pl.pallas_call(
        functools.partial(_ls_ce_partial_kernel, n_total=n,
                          use_mxu_rowsum=use_mxu_rowsum),
        out_shape=jax.ShapeDtypeStruct((num_tiles * 8, 128), jnp.float32),
        grid_spec=pltpu.PrefetchScalarGridSpec(
            num_scalar_prefetch=0,
            grid=(num_tiles,),
            in_specs=[
                pl.BlockSpec((tn, c), lambda i: (i, 0)),   # logits, native dtype
                pl.BlockSpec((tn, 1), lambda i: (i, 0)),   # targets
            ],
            out_specs=pl.BlockSpec((8, 128), lambda i: (i, 0)),
        ),
        compiler_params=pltpu.CompilerParams(
            dimension_semantics=("parallel",),             # v7x: shard tiles over both TCs
            vmem_limit_bytes=vmem_limit,
        ),
    )(logits, target2d)

    # Tiny epilogue: sublane 0 of each per-tile block carries (smooth, picked, 0...).
    totals = jnp.sum(partials.reshape(num_tiles, 8, 128)[:, 0, :], axis=0)  # (128,)
    smooth_sum = totals[0]          # sum over rows of  -sum_c log_softmax(x)_c
    picked_sum = totals[1]          # sum over rows of   log_softmax(x)[target]

    if reduction == "sum":
        smooth_loss = smooth_sum
        nll_loss = -picked_sum
    else:  # 'mean'
        smooth_loss = smooth_sum / n
        nll_loss = -picked_sum / n
    return smooth_loss * (eps / c) + (1.0 - eps) * nll_loss


def _reference(logits, target, eps=0.05):
    # pure-JAX reference matching the PyTorch forward (reduction='mean')
    c = logits.shape[-1]
    log_preds = jax.nn.log_softmax(logits.astype(jnp.float32), axis=-1)
    smooth = jnp.mean(-jnp.sum(log_preds, axis=-1))
    nll = jnp.mean(-jnp.take_along_axis(log_preds, target[:, None], axis=-1)[:, 0])
    return smooth * eps / c + (1.0 - eps) * nll


if __name__ == "__main__":
    key = jax.random.PRNGKey(0)
    k1, k2, k3, k4 = jax.random.split(key, 4)

    # Test 1: f32 logits, single tile (VPU rowsum path).
    N, C = 8, 32
    logits = jax.random.normal(k1, (N, C), dtype=jnp.float32)
    target = jax.random.randint(k2, (N,), 0, C, dtype=jnp.int32)
    loss = jax.block_until_ready(label_smoothing_cross_entropy(logits, target, eps=0.05))
    ref = _reference(logits, target, eps=0.05)
    assert jnp.allclose(loss, ref, atol=1e-5, rtol=1e-5), (loss, ref)

    # Test 2: bf16 logits streamed natively (MXU rowsum path), multiple tiles with a
    # masked partial last tile (N=24, TN=16 -> grid=2).
    N2, C2 = 24, 32
    logits2 = jax.random.normal(k3, (N2, C2), dtype=jnp.float32).astype(jnp.bfloat16)
    target2 = jax.random.randint(k4, (N2,), 0, C2, dtype=jnp.int32)
    loss2 = jax.block_until_ready(
        label_smoothing_cross_entropy(logits2, target2, eps=0.05, tile_rows=16))
    ref2 = _reference(logits2, target2, eps=0.05)
    assert jnp.allclose(loss2, ref2, atol=1e-4, rtol=1e-4), (loss2, ref2)

    print("KERNEL_OK")
</pallas_src>

<mosaic_0001>
module attributes {stable_mosaic.version = 11 : i64} {
  func.func @_ls_ce_partial_kernel(%arg0: i32, %arg1: memref<8x32xf32, #tpu.memory_space<vmem>>, %arg2: memref<8x1xi32, #tpu.memory_space<vmem>>, %arg3: memref<8x128xf32, #tpu.memory_space<vmem>>) attributes {dimension_semantics = [#tpu.dimension_semantics<parallel>], iteration_bounds = array<i64: 1>, scalar_prefetch = 0 : i64, scratch_operands = 0 : i64, tpu.core_type = #tpu.core_type<tc>, window_params = [{transform_indices = @transform_0, window_bounds = array<i64: 8, 32>}, {transform_indices = @transform_1, window_bounds = array<i64: 8, 1>}, {transform_indices = @transform_2, window_bounds = array<i64: 8, 128>}]} {
    %c0 = arith.constant 0 : index
    %c0_0 = arith.constant 0 : index
    %0 = vector.load %arg1[%c0, %c0_0] : memref<8x32xf32, #tpu.memory_space<vmem>>, vector<8x32xf32>
    %1 = tpu.iota {dimensions = array<i32: 0>} : vector<8x1xi32>
    %c8_i32 = arith.constant 8 : i32
    %2 = arith.muli %arg0, %c8_i32 : i32
    %3 = vector.broadcast %2 : i32 to vector<8x1xi32>
    %4 = arith.addi %1, %3 : vector<8x1xi32>
    %c8_i32_1 = arith.constant 8 : i32
    %5 = vector.broadcast %c8_i32_1 : i32 to vector<8x1xi32>
    %6 = arith.cmpi slt, %4, %5 : vector<8x1xi32>
    %cst = arith.constant dense<0xFF800000> : vector<8xf32>
    %7 = vector.multi_reduction <maximumf>, %0, %cst [1] : vector<8x32xf32> to vector<8xf32>
    %8 = vector.shape_cast %7 : vector<8xf32> to vector<8x1xf32>
    %9 = vector.broadcast %8 : vector<8x1xf32> to vector<8x32xf32>
    %10 = arith.subf %0, %9 : vector<8x32xf32>
    %11 = math.exp %10 : vector<8x32xf32>
    %cst_2 = arith.constant dense<0.000000e+00> : vector<8xf32>
    %12 = vector.multi_reduction <add>, %11, %cst_2 [1] : vector<8x32xf32> to vector<8xf32>
    %13 = vector.shape_cast %12 : vector<8xf32> to vector<8x1xf32>
    %14 = math.log %13 : vector<8x1xf32>
    %cst_3 = arith.constant dense<0.000000e+00> : vector<8xf32>
    %15 = vector.multi_reduction <add>, %0, %cst_3 [1] : vector<8x32xf32> to vector<8xf32>
    %16 = vector.shape_cast %15 : vector<8xf32> to vector<8x1xf32>
    %17 = arith.addf %8, %14 : vector<8x1xf32>
    %cst_4 = arith.constant 3.200000e+01 : f32
    %18 = vector.broadcast %cst_4 : f32 to vector<8x1xf32>
    %19 = arith.mulf %18, %17 : vector<8x1xf32>
    %20 = arith.subf %19, %16 : vector<8x1xf32>
    %21 = tpu.iota {dimensions = array<i32: 1>} : vector<1x32xi32>
    %c0_5 = arith.constant 0 : index
    %c0_6 = arith.constant 0 : index
    %22 = vector.load %arg2[%c0_5, %c0_6] : memref<8x1xi32, #tpu.memory_space<vmem>>, vector<8x1xi32>
    %23 = vector.broadcast %21 : vector<1x32xi32> to vector<8x32xi32>
    %24 = vector.broadcast %22 : vector<8x1xi32> to vector<8x32xi32>
    %25 = arith.cmpi eq, %23, %24 : vector<8x32xi32>
    %cst_7 = arith.constant 0.000000e+00 : f32
    %26 = vector.broadcast %cst_7 : f32 to vector<8x32xf32>
    %27 = arith.select %25, %0, %26 : vector<8x32xi1>, vector<8x32xf32>
    %cst_8 = arith.constant dense<0.000000e+00> : vector<8xf32>
    %28 = vector.multi_reduction <add>, %27, %cst_8 [1] : vector<8x32xf32> to vector<8xf32>
    %29 = vector.shape_cast %28 : vector<8xf32> to vector<8x1xf32>
    %30 = arith.subf %29, %8 : vector<8x1xf32>
    %31 = arith.subf %30, %14 : vector<8x1xf32>
    %cst_9 = arith.constant 0.000000e+00 : f32
    %32 = vector.broadcast %cst_9 : f32 to vector<8x1xf32>
    %33 = arith.select %6, %20, %32 : vector<8x1xi1>, vector<8x1xf32>
    %34 = vector.shape_cast %33 : vector<8x1xf32> to vector<1x8x1xf32>
    %cst_10 = arith.constant dense<0.000000e+00> : vector<1xf32>
    %35 = vector.multi_reduction <add>, %34, %cst_10 [1, 2] : vector<1x8x1xf32> to vector<1xf32>
    %36 = vector.shape_cast %35 : vector<1xf32> to vector<1x1x1xf32>
    %37 = vector.extract %36[0, 0, 0] : f32 from vector<1x1x1xf32>
    %cst_11 = arith.constant 0.000000e+00 : f32
    %38 = vector.broadcast %cst_11 : f32 to vector<8x1xf32>
    %39 = arith.select %6, %31, %38 : vector<8x1xi1>, vector<8x1xf32>
    %40 = vector.shape_cast %39 : vector<8x1xf32> to vector<1x8x1xf32>
    %cst_12 = arith.constant dense<0.000000e+00> : vector<1xf32>
    %41 = vector.multi_reduction <add>, %40, %cst_12 [1, 2] : vector<1x8x1xf32> to vector<1xf32>
    %42 = vector.shape_cast %41 : vector<1xf32> to vector<1x1x1xf32>
    %43 = vector.extract %42[0, 0, 0] : f32 from vector<1x1x1xf32>
    %44 = tpu.iota {dimensions = array<i32: 1>} : vector<8x128xi32>
    %c0_i32 = arith.constant 0 : i32
    %45 = vector.broadcast %c0_i32 : i32 to vector<8x128xi32>
    %46 = arith.cmpi eq, %44, %45 : vector<8x128xi32>
    %c1_i32 = arith.constant 1 : i32
    %47 = vector.broadcast %c1_i32 : i32 to vector<8x128xi32>
    %48 = arith.cmpi eq, %44, %47 : vector<8x128xi32>
    %cst_13 = arith.constant 0.000000e+00 : f32
    %49 = vector.broadcast %43 : f32 to vector<8x128xf32>
    %50 = vector.broadcast %cst_13 : f32 to vector<8x128xf32>
    %51 = arith.select %48, %49, %50 : vector<8x128xi1>, vector<8x128xf32>
    %52 = vector.broadcast %37 : f32 to vector<8x128xf32>
    %53 = arith.select %46, %52, %51 : vector<8x128xi1>, vector<8x128xf32>
    %c0_14 = arith.constant 0 : index
    %c0_15 = arith.constant 0 : index
    %54 = vector.load %arg3[%c0_14, %c0_15] : memref<8x128xf32, #tpu.memory_space<vmem>>, vector<8x128xf32>
    tpu.vector_store %arg3[%c0_14, %c0_15], %53 {strides = array<i32>} : memref<8x128xf32, #tpu.memory_space<vmem>>, vector<8x128xf32>,
    return
  }
  func.func @transform_0(%arg0: i32) -> (i32, i32) {
    %c0_i32 = arith.constant 0 : i32
    %c0_i32_0 = arith.constant 0 : i32
    return %arg0, %c0_i32 : i32, i32
  }
  func.func @transform_1(%arg0: i32) -> (i32, i32) {
    %c0_i32 = arith.constant 0 : i32
    %c0_i32_0 = arith.constant 0 : i32
    return %arg0, %c0_i32 : i32, i32
  }
  func.func @transform_2(%arg0: i32) -> (i32, i32) {
    %c0_i32 = arith.constant 0 : i32
    %c0_i32_0 = arith.constant 0 : i32
    return %arg0, %c0_i32 : i32, i32
  }
}

</mosaic_0001>

<llo_original>
// kernel: tpu_custom_call.1
$region0: #{tpu_custom_call.1}
  #allocation0 [shape = 'u32[]', space=smem, size = 0x4, offset = 0x4, fixed_abs, tag = 'smem constant byte address 0x4 - core index']
  #allocation1 [shape = 'u32[72,128]{1,0:T(1,128)}', space=vmem, size = 0x9000, scoped, tag = 'internal scratch']
  %s0 = inlined_call_operand.vmem [shape: f32[8,32], index: 0, kind: input, shape index: {}]
  %s1 = inlined_call_operand.vmem [shape: s32[8,1], index: 1, kind: input, shape index: {}]
  %s2 = inlined_call_operand.hbm [shape: f32[8,128], index: 2, kind: output, shape index: {}]
  %s3 = sld [smem:[#allocation0]]
  $region18: #{tpu_custom_call.1} parent=0
    _
  %s5 = ssub.s32 1, %s3
  %s6 = scalar_select 0, %s5, %s3
  $region1: #{tpu_custom_call.1} parent=0
    #allocation2 [shape = 'u8[4096]{0}', space=vmem, size = 0x1000, scoped, tag = 'output window, operand 0, single buffered']
    #allocation3 [shape = 's32[1]{0}', space=sflag, size = 0x4, scoped, tag = 'scoped memory for tpu_custom_call.1']
    %7 = vsyncpa [#allocation3], 0
    // Predicated region
    $region2: #{tpu_custom_call.1} parent=1 // pred_check
      _
    $region3: #{tpu_custom_call.1} parent=1 // pred_check_branch
      %9 = sbr.rel (0) target = $region5
    $region4: #{tpu_custom_call.1} parent=1 // pred_region
      _
    $region5: #{tpu_custom_call.1} parent=1 // pred_fallthru
      _
    // Predicated region
    $region6: #{tpu_custom_call.1} parent=1 // pred_check
      _
    $region7: #{tpu_custom_call.1} parent=1 // pred_check_branch
      %11 = sbr.rel (0) target = $region9
    $region8: #{tpu_custom_call.1} parent=1 // pred_region
      _
    $region9: #{tpu_custom_call.1} parent=1 // pred_fallthru
      _
    %v12 = vld [vmem:[%s0] sm:$0xff]
    %v13 = vlaneseq
    %v14 = vshrl.u32 %v13, 7
    %s15 = smul.u32 0, 8
    %v16 = vstv %s15
    %v17 = vadd.s32 %v14, %v16
    %vm18 = vcmp.lt.s32.totalorder %v17, 8
    %vm19 = vcmask 261120
    %v20 = vsel %vm19, %v12, -inf
    %21 = vmax.xlane.f32.xlu0 %v20
    %v22 = vpop.xlane.xlu0 %21
    %v23 = vsub.f32 %v12, %v22
    %v24 = vmul.f32 %v23, 1.442695
    %v25 = vpow.pop %v24
    %v26 = vsel %vm19, %v25, 0.0
    %27 = vadd.xlane.f32.xlu0 %v26
    %v28 = vpop.xlane.xlu0 %27
    %v29 = vlog2.pop %v28
    %v30 = vmul.f32 %v29, 0.6931472
    %v31 = vsel %vm19, %v12, 0.0
    %32 = vadd.xlane.f32.xlu0 %v31
    %v33 = vpop.xlane.xlu0 %32
    %v34 = vadd.f32 %v22, %v30
    %v35 = vmul.f32 %v34, 32.0
    %v36 = vsub.f32 %v35, %v33
    %v37 = vlaneseq
    %v38 = vand.u32 %v37, 127
    %v39 = vld [vmem:[%s1] sm:$0xff]
    %40 = vset.pattern.permute.xlu0 0
    %41 = vperm.xlu0 %40, %v39
    %v42 = vpop.permute.xlu0 %41
    %vm43 = vcmp.eq.s32.totalorder %v38, %v42
    %v44 = vsel %vm43, %v12, 0.0
    %v45 = vsel %vm19, %v44, 0.0
    %46 = vadd.xlane.f32.xlu0 %v45
    %v47 = vpop.xlane.xlu0 %46
    %v48 = vsub.f32 %v47, %v22
    %v49 = vsub.f32 %v48, %v30
    %v50 = vsel %vm18, %v36, 0.0
    %vm51 = vcmask 7168
    %v52 = vsel %vm51, %v50, 0.0
    %53 = vadd.xlane.f32.xlu0 %v52
    %v54 = vpop.xlane.xlu0 %53
    %v55 = vrot.slane %v54, 4
    %v56 = vadd.f32 %v54, %v55
    %v57 = vrot.slane %v56, 2
    %v58 = vadd.f32 %v56, %v57
    %v59 = vrot.slane %v58, 1
    %v60 = vadd.f32 %v58, %v59
    %s61 = vtos %v60
    %v62 = vsel %vm18, %v49, 0.0
    %v63 = vsel %vm51, %v62, 0.0
    %64 = vadd.xlane.f32.xlu0 %v63
    %v65 = vpop.xlane.xlu0 %64
    %v66 = vrot.slane %v65, 4
    %v67 = vadd.f32 %v65, %v66
    %v68 = vrot.slane %v67, 2
    %v69 = vadd.f32 %v67, %v68
    %v70 = vrot.slane %v69, 1
    %v71 = vadd.f32 %v69, %v70
    %s72 = vtos %v71
    %vm73 = vcmp.eq.s32.totalorder %v38, 0
    %vm74 = vcmp.eq.s32.totalorder %v38, 1
    %v75 = vstv %s72
    %v76 = vsel %vm74, %v75, 0.0
    %v77 = vstv %s61
    %v78 = vsel %vm73, %v77, %v76
    %79 = vst [vmem:[#allocation2] sm:$0xff] %v78
    // Predicated region
    $region10: #{tpu_custom_call.1} parent=1 // pred_check
      _
    $region11: #{tpu_custom_call.1} parent=1 // pred_check_branch
      %81 = sbr.rel (0) target = $region13
    $region12: #{tpu_custom_call.1} parent=1 // pred_region
      %83 = vsyncadd [#allocation3], 0
      %s85 = sshll.u32 [#allocation2], 4
      %s86 = int_to_ptr.vmem [resolvable:$true] %s85
      %s87 = sshll.u32 %s2, 4
      %s88 = int_to_ptr.hbm [resolvable:$true] %s87
      %90 = dma.vmem_to_hbm [thread:$0]  %s86, 128, %s88, [#allocation3]
    $region13: #{tpu_custom_call.1} parent=1 // pred_fallthru
      _
    // Predicated region
    $region14: #{tpu_custom_call.1} parent=1 // pred_check
      _
    $region15: #{tpu_custom_call.1} parent=1 // pred_check_branch
      %92 = sbr.rel (0) target = $region17
    $region16: #{tpu_custom_call.1} parent=1 // pred_region
      %94 = dma.done [#allocation3], 128
    $region17: #{tpu_custom_call.1} parent=1 // pred_fallthru
      _
    %95 = vsyncpa [#allocation3], 1

</llo_original>
